<compile_context>
chip_gen: v7x
topology: tpu7x:2x2x1
jax: 0.10.0
libtpu: 0.0.40
codegen_flags: <defaults>
</compile_context>

<pallas_src>
import functools

import jax
import jax.numpy as jnp
from jax.experimental import pallas as pl
from jax.experimental.pallas import tpu as pltpu

NO_STATES = 42    # 6x7 Connect-4 board
NO_ACTIONS = 7    # 7 columns
HIDDEN = 128
OUT_PAD = 128     # lane-dense fc3 output width (zero-padded; sliced back to NO_ACTIONS)


def _round_up(n, m):
    return ((n + m - 1) // m) * m


def qconnect_kernel(x_ref, w1_ref, b1_ref, w2_ref, b2_ref, w3_ref, b3_ref, o_ref):
    # Layer 1: (TB, S)bf16 @ (S, H)bf16 -> f32 acc, + bias, relu
    h1 = jnp.dot(x_ref[...], w1_ref[...], preferred_element_type=jnp.float32)
    h1 = jnp.maximum(h1 + b1_ref[...], 0.0)
    # Layer 2: (TB, H) @ (H, H)
    h2 = jnp.dot(h1.astype(jnp.bfloat16), w2_ref[...], preferred_element_type=jnp.float32)
    h2 = jnp.maximum(h2 + b2_ref[...], 0.0)
    # Layer 3: (TB, H) @ (H, OUT_PAD)  -- lane-dense padded output, no relu
    o = jnp.dot(h2.astype(jnp.bfloat16), w3_ref[...], preferred_element_type=jnp.float32)
    o_ref[...] = (o + b3_ref[...]).astype(o_ref.dtype)


def prepare_params(params):
    """One-time conversion of PyTorch-convention params to kernel layout.

    - transpose weights to (in, out) so each layer is x @ W + b on the MXU,
    - cast weights to bf16 (kernel accumulates in f32),
    - zero-pad fc3 output dim NO_ACTIONS -> OUT_PAD for lane-dense stores,
    - biases as (1, out) f32 rows.
    Call once when params are created/updated, NOT per forward.
    """
    a, h = params["w3"].shape
    w1t = params["w1"].T.astype(jnp.bfloat16)                       # (S, H)
    w2t = params["w2"].T.astype(jnp.bfloat16)                       # (H, H)
    w3t = jnp.zeros((h, OUT_PAD), jnp.bfloat16).at[:, :a].set(
        params["w3"].T.astype(jnp.bfloat16))                        # (H, OUT_PAD)
    b1r = params["b1"].reshape(1, -1).astype(jnp.float32)           # (1, H)
    b2r = params["b2"].reshape(1, -1).astype(jnp.float32)           # (1, H)
    b3r = jnp.zeros((1, OUT_PAD), jnp.float32).at[0, :a].set(
        params["b3"].astype(jnp.float32))                           # (1, OUT_PAD)
    return {"w1t": w1t, "b1r": b1r, "w2t": w2t, "b2r": b2r, "w3t": w3t, "b3r": b3r}


@functools.partial(jax.jit, static_argnames=("tile_b", "no_actions"))
def qconnect_forward(x, prep, *, tile_b=256, no_actions=NO_ACTIONS):
    """x: (B, no_states) float32. prep: output of prepare_params()."""
    B, S = x.shape

    # Batch tile: tile_b for real replay batches, clamped down for tiny batches.
    tb = min(tile_b, _round_up(B, 8))
    Bp = _round_up(B, tb)

    xb = x.astype(jnp.bfloat16)
    if Bp != B:
        xb = jnp.zeros((Bp, S), jnp.bfloat16).at[:B].set(xb)

    # Weights/biases: same block every grid step -> DMA'd once, VMEM-resident.
    resident = lambda arr: pl.BlockSpec(arr.shape, lambda i: (0,) * arr.ndim)

    out = pl.pallas_call(
        qconnect_kernel,
        out_shape=jax.ShapeDtypeStruct((Bp, OUT_PAD), jnp.float32),
        grid_spec=pl.GridSpec(
            grid=(Bp // tb,),
            in_specs=[
                pl.BlockSpec((tb, S), lambda i: (i, 0)),     # x streams over batch
                resident(prep["w1t"]), resident(prep["b1r"]),
                resident(prep["w2t"]), resident(prep["b2r"]),
                resident(prep["w3t"]), resident(prep["b3r"]),
            ],
            out_specs=pl.BlockSpec((tb, OUT_PAD), lambda i: (i, 0)),
        ),
        compiler_params=pltpu.CompilerParams(
            dimension_semantics=("parallel",),
            vmem_limit_bytes=32 << 20,
        ),
    )(xb, prep["w1t"], prep["b1r"], prep["w2t"], prep["b2r"], prep["w3t"], prep["b3r"])

    return out[:B, :no_actions]


def make_params(key, no_states=NO_STATES, no_actions=NO_ACTIONS, hidden=HIDDEN):
    """Deterministic synthetic params with PyTorch nn.Linear shape conventions (f32)."""
    ks = jax.random.split(key, 6)

    def init(k, shape, fan_in):
        bound = 1.0 / jnp.sqrt(fan_in)
        return jax.random.uniform(k, shape, jnp.float32, -bound, bound)

    return {
        "w1": init(ks[0], (hidden, no_states), no_states),
        "b1": init(ks[1], (hidden,), no_states),
        "w2": init(ks[2], (hidden, hidden), hidden),
        "b2": init(ks[3], (hidden,), hidden),
        "w3": init(ks[4], (no_actions, hidden), hidden),
        "b3": init(ks[5], (no_actions,), hidden),
    }


def reference_forward(x, p):
    h1 = jnp.maximum(x @ p["w1"].T + p["b1"], 0.0)
    h2 = jnp.maximum(h1 @ p["w2"].T + p["b2"], 0.0)
    return h2 @ p["w3"].T + p["b3"]


# TODO(synk): sample_action's epsilon-greedy masking/argmax is host-side control flow
# over the Q-values; it stays outside the kernel (apply -inf mask + argmax on the output).

if __name__ == "__main__":
    key = jax.random.PRNGKey(0)
    k_x, k_p = jax.random.split(key)

    params = make_params(k_p)
    prep = prepare_params(params)

    # Small-shape check (batch=8) — kernel uses a single 8-row tile.
    batch = 8
    x = jax.random.normal(k_x, (batch, NO_STATES), jnp.float32)
    out = jax.block_until_ready(qconnect_forward(x, prep))
    ref = reference_forward(x, params)
    assert out.shape == (batch, NO_ACTIONS)
    assert jnp.allclose(out, ref, atol=1e-1, rtol=5e-2), "mismatch vs JAX reference (B=8)"

    # Multi-tile grid check (batch=512, tile_b=256 -> 2 parallel grid steps).
    x_big = jax.random.normal(k_x, (512, NO_STATES), jnp.float32)
    out_big = jax.block_until_ready(qconnect_forward(x_big, prep, tile_b=256))
    ref_big = reference_forward(x_big, params)
    assert out_big.shape == (512, NO_ACTIONS)
    assert jnp.allclose(out_big, ref_big, atol=1e-1, rtol=5e-2), "mismatch vs JAX reference (B=512)"

    print("KERNEL_OK")
</pallas_src>

<mosaic_0001>
module attributes {stable_mosaic.version = 11 : i64} {
  func.func @qconnect_kernel(%arg0: i32, %arg1: memref<8x42xbf16, #tpu.memory_space<vmem>>, %arg2: memref<42x128xbf16, #tpu.memory_space<vmem>>, %arg3: memref<1x128xf32, #tpu.memory_space<vmem>>, %arg4: memref<128x128xbf16, #tpu.memory_space<vmem>>, %arg5: memref<1x128xf32, #tpu.memory_space<vmem>>, %arg6: memref<128x128xbf16, #tpu.memory_space<vmem>>, %arg7: memref<1x128xf32, #tpu.memory_space<vmem>>, %arg8: memref<8x128xf32, #tpu.memory_space<vmem>>) attributes {dimension_semantics = [#tpu.dimension_semantics<parallel>], iteration_bounds = array<i64: 1>, scalar_prefetch = 0 : i64, scratch_operands = 0 : i64, tpu.core_type = #tpu.core_type<tc>, window_params = [{transform_indices = @transform_0, window_bounds = array<i64: 8, 42>}, {pipeline_mode = #tpu.pipeline_mode<synchronous>, transform_indices = @transform_1, window_bounds = array<i64: 42, 128>}, {pipeline_mode = #tpu.pipeline_mode<synchronous>, transform_indices = @transform_2, window_bounds = array<i64: 1, 128>}, {pipeline_mode = #tpu.pipeline_mode<synchronous>, transform_indices = @transform_3, window_bounds = array<i64: 128, 128>}, {pipeline_mode = #tpu.pipeline_mode<synchronous>, transform_indices = @transform_4, window_bounds = array<i64: 1, 128>}, {pipeline_mode = #tpu.pipeline_mode<synchronous>, transform_indices = @transform_5, window_bounds = array<i64: 128, 128>}, {pipeline_mode = #tpu.pipeline_mode<synchronous>, transform_indices = @transform_6, window_bounds = array<i64: 1, 128>}, {transform_indices = @transform_7, window_bounds = array<i64: 8, 128>}]} {
    %c0 = arith.constant 0 : index
    %c0_0 = arith.constant 0 : index
    %0 = vector.load %arg1[%c0, %c0_0] : memref<8x42xbf16, #tpu.memory_space<vmem>>, vector<8x42xbf16>
    %c0_1 = arith.constant 0 : index
    %c0_2 = arith.constant 0 : index
    %1 = vector.load %arg2[%c0_1, %c0_2] : memref<42x128xbf16, #tpu.memory_space<vmem>>, vector<42x128xbf16>
    %cst = arith.constant dense<0.000000e+00> : vector<8x128xf32>
    %2 = tpu.matmul %0, %1, %cst {dimension_numbers = #tpu.dot_dimension_numbers<[1], [0], [0], [1], [0, 0, 1, 1], [], []>} : vector<8x42xbf16>, vector<42x128xbf16>, vector<8x128xf32> -> vector<8x128xf32>
    %c0_3 = arith.constant 0 : index
    %c0_4 = arith.constant 0 : index
    %3 = vector.load %arg3[%c0_3, %c0_4] : memref<1x128xf32, #tpu.memory_space<vmem>>, vector<1x128xf32>
    %4 = vector.broadcast %3 : vector<1x128xf32> to vector<8x128xf32>
    %5 = arith.addf %2, %4 : vector<8x128xf32>
    %cst_5 = arith.constant 0.000000e+00 : f32
    %6 = vector.broadcast %cst_5 : f32 to vector<8x128xf32>
    %7 = arith.maximumf %5, %6 : vector<8x128xf32>
    %8 = arith.truncf %7 : vector<8x128xf32> to vector<8x128xbf16>
    %c0_6 = arith.constant 0 : index
    %c0_7 = arith.constant 0 : index
    %9 = vector.load %arg4[%c0_6, %c0_7] : memref<128x128xbf16, #tpu.memory_space<vmem>>, vector<128x128xbf16>
    %cst_8 = arith.constant dense<0.000000e+00> : vector<8x128xf32>
    %10 = tpu.matmul %8, %9, %cst_8 {dimension_numbers = #tpu.dot_dimension_numbers<[1], [0], [0], [1], [0, 0, 1, 1], [], []>} : vector<8x128xbf16>, vector<128x128xbf16>, vector<8x128xf32> -> vector<8x128xf32>
    %c0_9 = arith.constant 0 : index
    %c0_10 = arith.constant 0 : index
    %11 = vector.load %arg5[%c0_9, %c0_10] : memref<1x128xf32, #tpu.memory_space<vmem>>, vector<1x128xf32>
    %12 = vector.broadcast %11 : vector<1x128xf32> to vector<8x128xf32>
    %13 = arith.addf %10, %12 : vector<8x128xf32>
    %cst_11 = arith.constant 0.000000e+00 : f32
    %14 = vector.broadcast %cst_11 : f32 to vector<8x128xf32>
    %15 = arith.maximumf %13, %14 : vector<8x128xf32>
    %16 = arith.truncf %15 : vector<8x128xf32> to vector<8x128xbf16>
    %c0_12 = arith.constant 0 : index
    %c0_13 = arith.constant 0 : index
    %17 = vector.load %arg6[%c0_12, %c0_13] : memref<128x128xbf16, #tpu.memory_space<vmem>>, vector<128x128xbf16>
    %cst_14 = arith.constant dense<0.000000e+00> : vector<8x128xf32>
    %18 = tpu.matmul %16, %17, %cst_14 {dimension_numbers = #tpu.dot_dimension_numbers<[1], [0], [0], [1], [0, 0, 1, 1], [], []>} : vector<8x128xbf16>, vector<128x128xbf16>, vector<8x128xf32> -> vector<8x128xf32>
    %c0_15 = arith.constant 0 : index
    %c0_16 = arith.constant 0 : index
    %19 = vector.load %arg7[%c0_15, %c0_16] : memref<1x128xf32, #tpu.memory_space<vmem>>, vector<1x128xf32>
    %20 = vector.broadcast %19 : vector<1x128xf32> to vector<8x128xf32>
    %21 = arith.addf %18, %20 : vector<8x128xf32>
    %c0_17 = arith.constant 0 : index
    %c0_18 = arith.constant 0 : index
    %22 = vector.load %arg8[%c0_17, %c0_18] : memref<8x128xf32, #tpu.memory_space<vmem>>, vector<8x128xf32>
    tpu.vector_store %arg8[%c0_17, %c0_18], %21 {strides = array<i32>} : memref<8x128xf32, #tpu.memory_space<vmem>>, vector<8x128xf32>,
    return
  }
  func.func @transform_0(%arg0: i32) -> (i32, i32) {
    %c0_i32 = arith.constant 0 : i32
    %c0_i32_0 = arith.constant 0 : i32
    return %arg0, %c0_i32 : i32, i32
  }
  func.func @transform_1(%arg0: i32) -> (i32, i32) {
    %c0_i32 = arith.constant 0 : i32
    %c0_i32_0 = arith.constant 0 : i32
    %c0_i32_1 = arith.constant 0 : i32
    return %c0_i32, %c0_i32_0 : i32, i32
  }
  func.func @transform_2(%arg0: i32) -> (i32, i32) {
    %c0_i32 = arith.constant 0 : i32
    %c0_i32_0 = arith.constant 0 : i32
    %c0_i32_1 = arith.constant 0 : i32
    return %c0_i32, %c0_i32_0 : i32, i32
  }
  func.func @transform_3(%arg0: i32) -> (i32, i32) {
    %c0_i32 = arith.constant 0 : i32
    %c0_i32_0 = arith.constant 0 : i32
    %c0_i32_1 = arith.constant 0 : i32
    return %c0_i32, %c0_i32_0 : i32, i32
  }
  func.func @transform_4(%arg0: i32) -> (i32, i32) {
    %c0_i32 = arith.constant 0 : i32
    %c0_i32_0 = arith.constant 0 : i32
    %c0_i32_1 = arith.constant 0 : i32
    return %c0_i32, %c0_i32_0 : i32, i32
  }
  func.func @transform_5(%arg0: i32) -> (i32, i32) {
    %c0_i32 = arith.constant 0 : i32
    %c0_i32_0 = arith.constant 0 : i32
    %c0_i32_1 = arith.constant 0 : i32
    return %c0_i32, %c0_i32_0 : i32, i32
  }
  func.func @transform_6(%arg0: i32) -> (i32, i32) {
    %c0_i32 = arith.constant 0 : i32
    %c0_i32_0 = arith.constant 0 : i32
    %c0_i32_1 = arith.constant 0 : i32
    return %c0_i32, %c0_i32_0 : i32, i32
  }
  func.func @transform_7(%arg0: i32) -> (i32, i32) {
    %c0_i32 = arith.constant 0 : i32
    %c0_i32_0 = arith.constant 0 : i32
    return %arg0, %c0_i32 : i32, i32
  }
}

</mosaic_0001>

<llo_original>
// kernel: qconnect_forward.1
$region0: #{qconnect_forward.1}
  #allocation0 [shape = 'u32[]', space=smem, size = 0x4, offset = 0x4, fixed_abs, tag = 'smem constant byte address 0x4 - core index']
  #allocation1 [shape = 'u32[144,128]{1,0:T(1,128)}', space=vmem, size = 0x12000, scoped, tag = 'internal scratch']
  %s0 = inlined_call_operand.vmem [shape: bf16[8,42], index: 0, kind: input, shape index: {}]
  %s1 = inlined_call_operand.vmem [shape: bf16[42,128], index: 1, kind: input, shape index: {}]
  %s2 = inlined_call_operand.vmem [shape: f32[1,128], index: 2, kind: input, shape index: {}]
  %s3 = inlined_call_operand.hbm [shape: bf16[128,128], index: 3, kind: input, shape index: {}]
  %s4 = inlined_call_operand.vmem [shape: f32[1,128], index: 4, kind: input, shape index: {}]
  %s5 = inlined_call_operand.hbm [shape: bf16[128,128], index: 5, kind: input, shape index: {}]
  %s6 = inlined_call_operand.vmem [shape: f32[1,128], index: 6, kind: input, shape index: {}]
  %s7 = inlined_call_operand.hbm [shape: f32[8,128], index: 7, kind: output, shape index: {}]
  %s8 = sld [smem:[#allocation0]]
  $region46: #{qconnect_forward.1} parent=0
    _
  %s10 = ssub.s32 1, %s8
  %s11 = scalar_select 0, %s10, %s8
  $region1: #{qconnect_forward.1} parent=0
    #allocation2 [shape = 'u8[32768]{0}', space=vmem, size = 0x8000, scoped, tag = 'input window, operand 3, single buffered']
    #allocation3 [shape = 's32[1]{0}', space=sflag, size = 0x4, scoped, tag = 'scoped memory for qconnect_forward.1']
    #allocation4 [shape = 's32[1]{0}', space=sflag, size = 0x4, scoped, tag = 'scoped memory for qconnect_forward.1']
    #allocation5 [shape = 'u8[32768]{0}', space=vmem, size = 0x8000, scoped, tag = 'input window, operand 5, single buffered']
    #allocation6 [shape = 's32[1]{0}', space=sflag, size = 0x4, scoped, tag = 'scoped memory for qconnect_forward.1']
    #allocation7 [shape = 'u8[4096]{0}', space=vmem, size = 0x1000, scoped, tag = 'output window, operand 0, single buffered']
    %12 = vsyncpa [#allocation3], 0
    %13 = vsyncpa [#allocation6], 0
    %14 = vsyncpa [#allocation4], 0
    // Predicated region
    $region2: #{qconnect_forward.1} parent=1 // pred_check
      _
    $region3: #{qconnect_forward.1} parent=1 // pred_check_branch
      %16 = sbr.rel (0) target = $region5
    $region4: #{qconnect_forward.1} parent=1 // pred_region
      _
    $region5: #{qconnect_forward.1} parent=1 // pred_fallthru
      _
    // Predicated region
    $region6: #{qconnect_forward.1} parent=1 // pred_check
      _
    $region7: #{qconnect_forward.1} parent=1 // pred_check_branch
      %18 = sbr.rel (0) target = $region9
    $region8: #{qconnect_forward.1} parent=1 // pred_region
      _
    $region9: #{qconnect_forward.1} parent=1 // pred_fallthru
      _
    // Predicated region
    $region10: #{qconnect_forward.1} parent=1 // pred_check
      _
    $region11: #{qconnect_forward.1} parent=1 // pred_check_branch
      %20 = sbr.rel (0) target = $region13
    $region12: #{qconnect_forward.1} parent=1 // pred_region
      _
    $region13: #{qconnect_forward.1} parent=1 // pred_fallthru
      _
    // Predicated region
    $region14: #{qconnect_forward.1} parent=1 // pred_check
      _
    $region15: #{qconnect_forward.1} parent=1 // pred_check_branch
      %22 = sbr.rel (0) target = $region17
    $region16: #{qconnect_forward.1} parent=1 // pred_region
      %s24 = ssub.s32 1024, 1024
      %25 = vsyncadd [#allocation3], %s24
      %s26 = sshll.u32 [#allocation2], 4
      %s27 = int_to_ptr.vmem [resolvable:$true] %s26
      %32 = dma.hbm_to_vmem [thread:$0]  %s3, 1024, %s27, [#allocation3], 64, 64, 4
    $region17: #{qconnect_forward.1} parent=1 // pred_fallthru
      _
    // Predicated region
    $region18: #{qconnect_forward.1} parent=1 // pred_check
      _
    $region19: #{qconnect_forward.1} parent=1 // pred_check_branch
      %34 = sbr.rel (0) target = $region21
    $region20: #{qconnect_forward.1} parent=1 // pred_region
      _
    $region21: #{qconnect_forward.1} parent=1 // pred_fallthru
      _
    // Predicated region
    $region22: #{qconnect_forward.1} parent=1 // pred_check
      _
    $region23: #{qconnect_forward.1} parent=1 // pred_check_branch
      %36 = sbr.rel (0) target = $region25
    $region24: #{qconnect_forward.1} parent=1 // pred_region
      %s38 = ssub.s32 1024, 1024
      %39 = vsyncadd [#allocation6], %s38
      %s40 = sshll.u32 [#allocation5], 4
      %s41 = int_to_ptr.vmem [resolvable:$true] %s40
      %46 = dma.hbm_to_vmem [thread:$0]  %s5, 1024, %s41, [#allocation6], 64, 64, 4
    $region25: #{qconnect_forward.1} parent=1 // pred_fallthru
      _
    // Predicated region
    $region26: #{qconnect_forward.1} parent=1 // pred_check
      _
    $region27: #{qconnect_forward.1} parent=1 // pred_check_branch
      %48 = sbr.rel (0) target = $region29
    $region28: #{qconnect_forward.1} parent=1 // pred_region
      _
    $region29: #{qconnect_forward.1} parent=1 // pred_fallthru
      _
    // Predicated region
    $region30: #{qconnect_forward.1} parent=1 // pred_check
      _
    $region31: #{qconnect_forward.1} parent=1 // pred_check_branch
      %50 = sbr.rel (0) target = $region33
    $region32: #{qconnect_forward.1} parent=1 // pred_region
      %51 = dma.done [#allocation3], 1024
    $region33: #{qconnect_forward.1} parent=1 // pred_fallthru
      _
    // Predicated region
    $region34: #{qconnect_forward.1} parent=1 // pred_check
      _
    $region35: #{qconnect_forward.1} parent=1 // pred_check_branch
      %53 = sbr.rel (0) target = $region37
    $region36: #{qconnect_forward.1} parent=1 // pred_region
      %54 = dma.done [#allocation6], 1024
    $region37: #{qconnect_forward.1} parent=1 // pred_fallthru
      _
    %v56 = vld [vmem:[%s0] sm:$0xf]
    %v57 = vld [vmem:[%s1] sm:$0xf]
    %v58 = vld [vmem:[%s1 + $0x4] sm:$0xf]
    %v59 = vld [vmem:[%s1 + $0x8] sm:$0xf]
    %v60 = vld [vmem:[%s1 + $0xc] sm:$0xf]
    %v61 = vld [vmem:[%s1 + $0x10] sm:$0xf]
    %v62 = vld [vmem:[%s1 + $0x14] sm:$0x1]
    %v63 = vld [vmem:[%s2] sm:$0x1]
    %v65 = vlaneseq
    %v66 = vshrl.u32 %v65, 7
    %v67 = vsub.s32 0, %v66
    %v68 = vrot.slane %v63, %v67
    %v76 = vunpack.c.l.b16 %v57
    %v77 = vunpack.c.l.b16 %v58
    %v78 = vunpack.c.l.b16 %v59
    %v79 = vunpack.c.l.b16 %v60
    %v80 = vunpack.c.l.b16 %v61
    %v81 = vunpack.c.l.b16 %v62
    %v82 = vpack.c.b16 %v77, %v76
    %v83 = vpack.c.b16 %v79, %v78
    %v84 = vpack.c.b16 %v81, %v80
    %vm87 = vcmask 343040
    %v89 = vsel %vm87, %v56, 0
    %vm91 = vcmask 1044480
    %v93 = vsel %vm91, %v84, 0
    %95 = vmatprep.subr.bf16.mxu0 0
    %96 = vmatpush1.bf16.msra.mxu0 %v82
    %97 = vmatprep.subr.bf16.mxu0 0
    %98 = vmatpush1.bf16.msra.mxu0 %v83
    %99 = vmatprep.subr.bf16.mxu0 0
    %100 = vmatpush1.bf16.msra.mxu0 %v93
    %101 = vmatprep.subr.bf16.mxu0 0
    %102 = vmatpush1.bf16.msra.mxu0 0
    %103 = vmatprep.subr.bf16.mxu0 0
    %104 = vmatpush1.bf16.msra.mxu0 0
    %105 = vmatprep.subr.bf16.mxu0 0
    %106 = vmatpush1.bf16.msra.mxu0 0
    %107 = vmatprep.subr.bf16.mxu0 0
    %108 = vmatpush1.bf16.msra.mxu0 0
    %109 = vmatprep.subr.bf16.mxu0 0
    %110 = vmatpush1.bf16.msra.mxu0 0
    %111 = vmatprep.subr.bf16.mxu0 0
    %112 = vmatpush1.bf16.msra.mxu0 0
    %113 = vmatprep.subr.bf16.mxu0 0
    %114 = vmatpush1.bf16.msra.mxu0 0
    %115 = vmatprep.subr.bf16.mxu0 0
    %116 = vmatpush1.bf16.msra.mxu0 0
    %117 = vmatprep.subr.bf16.mxu0 0
    %118 = vmatpush1.bf16.msra.mxu0 0
    %119 = vmatprep.subr.bf16.mxu0 0
    %120 = vmatpush1.bf16.msra.mxu0 0
    %121 = vmatprep.subr.bf16.mxu0 0
    %122 = vmatpush1.bf16.msra.mxu0 0
    %123 = vmatprep.subr.bf16.mxu0 0
    %124 = vmatpush1.bf16.msra.mxu0 0
    %125 = vmatprep.subr.bf16.mxu0 0
    %126 = vmatpush1.bf16.msra.mxu0 0
    %127 = vmatprep.mubr.bf16.mxu0 0
    %128 = vmatmul.mubr.bf16.gmra.mrb[0].mxu0 %v89
    %v129 = vpop.f32.mrb[0].mxu0
    %v130 = vadd.f32 %v68, %v129
    %v131 = vpop.f32.mrb[0].mxu0
    %v132 = vpop.f32.mrb[0].mxu0
    %v133 = vpop.f32.mrb[0].mxu0
    %134 = vdwg.mxu0
    %v135 = vmax.f32 %v130, 0.0
    %v136 = vpack.c.bf16 %v135, %v135
    %v137 = vld [vmem:[#allocation2] sm:$0xf]
    %v138 = vld [vmem:[#allocation2 + $0x4] sm:$0xf]
    %v139 = vld [vmem:[#allocation2 + $0x8] sm:$0xf]
    %v140 = vld [vmem:[#allocation2 + $0xc] sm:$0xf]
    %v141 = vld [vmem:[#allocation2 + $0x10] sm:$0xf]
    %v142 = vld [vmem:[#allocation2 + $0x14] sm:$0xf]
    %v143 = vld [vmem:[#allocation2 + $0x18] sm:$0xf]
    %v144 = vld [vmem:[#allocation2 + $0x1c] sm:$0xf]
    %v145 = vld [vmem:[#allocation2 + $0x20] sm:$0xf]
    %v146 = vld [vmem:[#allocation2 + $0x24] sm:$0xf]
    %v147 = vld [vmem:[#allocation2 + $0x28] sm:$0xf]
    %v148 = vld [vmem:[#allocation2 + $0x2c] sm:$0xf]
    %v149 = vld [vmem:[#allocation2 + $0x30] sm:$0xf]
    %v150 = vld [vmem:[#allocation2 + $0x34] sm:$0xf]
    %v151 = vld [vmem:[#allocation2 + $0x38] sm:$0xf]
    %v152 = vld [vmem:[#allocation2 + $0x3c] sm:$0xf]
    %v153 = vld [vmem:[%s4] sm:$0x1]
    %v155 = vlaneseq
    %v156 = vshrl.u32 %v155, 7
    %v157 = vsub.s32 0, %v156
    %v158 = vrot.slane %v153, %v157
    %v176 = vunpack.c.l.b16 %v137
    %v177 = vunpack.c.l.b16 %v138
    %v178 = vunpack.c.l.b16 %v139
    %v179 = vunpack.c.l.b16 %v140
    %v180 = vunpack.c.l.b16 %v141
    %v181 = vunpack.c.l.b16 %v142
    %v182 = vunpack.c.l.b16 %v143
    %v183 = vunpack.c.l.b16 %v144
    %v184 = vunpack.c.l.b16 %v145
    %v185 = vunpack.c.l.b16 %v146
    %v186 = vunpack.c.l.b16 %v147
    %v187 = vunpack.c.l.b16 %v148
    %v188 = vunpack.c.l.b16 %v149
    %v189 = vunpack.c.l.b16 %v150
    %v190 = vunpack.c.l.b16 %v151
    %v191 = vunpack.c.l.b16 %v152
    %v192 = vpack.c.b16 %v177, %v176
    %v193 = vpack.c.b16 %v179, %v178
    %v194 = vpack.c.b16 %v181, %v180
    %v195 = vpack.c.b16 %v183, %v182
    %v196 = vpack.c.b16 %v185, %v184
    %v197 = vpack.c.b16 %v187, %v186
    %v198 = vpack.c.b16 %v189, %v188
    %v199 = vpack.c.b16 %v191, %v190
    %208 = vmatprep.subr.bf16.mxu0 0
    %209 = vmatpush1.bf16.msra.mxu0 %v192
    %210 = vmatprep.subr.bf16.mxu0 0
    %211 = vmatpush1.bf16.msra.mxu0 %v193
    %212 = vmatprep.subr.bf16.mxu0 0
    %213 = vmatpush1.bf16.msra.mxu0 %v194
    %214 = vmatprep.subr.bf16.mxu0 0
    %215 = vmatpush1.bf16.msra.mxu0 %v195
    %216 = vmatprep.subr.bf16.mxu0 0
    %217 = vmatpush1.bf16.msra.mxu0 %v196
    %218 = vmatprep.subr.bf16.mxu0 0
    %219 = vmatpush1.bf16.msra.mxu0 %v197
    %220 = vmatprep.subr.bf16.mxu0 0
    %221 = vmatpush1.bf16.msra.mxu0 %v198
    %222 = vmatprep.subr.bf16.mxu0 0
    %223 = vmatpush1.bf16.msra.mxu0 %v199
    %224 = vmatprep.subr.bf16.mxu0 0
    %225 = vmatpush1.bf16.msra.mxu0 0
    %226 = vmatprep.subr.bf16.mxu0 0
    %227 = vmatpush1.bf16.msra.mxu0 0
    %228 = vmatprep.subr.bf16.mxu0 0
    %229 = vmatpush1.bf16.msra.mxu0 0
    %230 = vmatprep.subr.bf16.mxu0 0
    %231 = vmatpush1.bf16.msra.mxu0 0
    %232 = vmatprep.subr.bf16.mxu0 0
    %233 = vmatpush1.bf16.msra.mxu0 0
    %234 = vmatprep.subr.bf16.mxu0 0
    %235 = vmatpush1.bf16.msra.mxu0 0
    %236 = vmatprep.subr.bf16.mxu0 0
    %237 = vmatpush1.bf16.msra.mxu0 0
    %238 = vmatprep.subr.bf16.mxu0 0
    %239 = vmatpush1.bf16.msra.mxu0 0
    %240 = vmatprep.mubr.bf16.mxu0 0
    %241 = vmatmul.mubr.bf16.gmra.mrb[0].mxu0 %v136
    %v242 = vpop.f32.mrb[0].mxu0
    %v243 = vadd.f32 %v158, %v242
    %v244 = vpop.f32.mrb[0].mxu0
    %v245 = vpop.f32.mrb[0].mxu0
    %v246 = vpop.f32.mrb[0].mxu0
    %247 = vdwg.mxu0
    %v248 = vmax.f32 %v243, 0.0
    %v249 = vpack.c.bf16 %v248, %v248
    %v250 = vld [vmem:[#allocation5] sm:$0xf]
    %v251 = vld [vmem:[#allocation5 + $0x4] sm:$0xf]
    %v252 = vld [vmem:[#allocation5 + $0x8] sm:$0xf]
    %v253 = vld [vmem:[#allocation5 + $0xc] sm:$0xf]
    %v254 = vld [vmem:[#allocation5 + $0x10] sm:$0xf]
    %v255 = vld [vmem:[#allocation5 + $0x14] sm:$0xf]
    %v256 = vld [vmem:[#allocation5 + $0x18] sm:$0xf]
    %v257 = vld [vmem:[#allocation5 + $0x1c] sm:$0xf]
    %v258 = vld [vmem:[#allocation5 + $0x20] sm:$0xf]
    %v259 = vld [vmem:[#allocation5 + $0x24] sm:$0xf]
    %v260 = vld [vmem:[#allocation5 + $0x28] sm:$0xf]
    %v261 = vld [vmem:[#allocation5 + $0x2c] sm:$0xf]
    %v262 = vld [vmem:[#allocation5 + $0x30] sm:$0xf]
    %v263 = vld [vmem:[#allocation5 + $0x34] sm:$0xf]
    %v264 = vld [vmem:[#allocation5 + $0x38] sm:$0xf]
    %v265 = vld [vmem:[#allocation5 + $0x3c] sm:$0xf]
    %v266 = vld [vmem:[%s6] sm:$0x1]
    %v268 = vlaneseq
    %v269 = vshrl.u32 %v268, 7
    %v270 = vsub.s32 0, %v269
    %v271 = vrot.slane %v266, %v270
    %v289 = vunpack.c.l.b16 %v250
    %v290 = vunpack.c.l.b16 %v251
    %v291 = vunpack.c.l.b16 %v252
    %v292 = vunpack.c.l.b16 %v253
    %v293 = vunpack.c.l.b16 %v254
    %v294 = vunpack.c.l.b16 %v255
    %v295 = vunpack.c.l.b16 %v256
    %v296 = vunpack.c.l.b16 %v257
    %v297 = vunpack.c.l.b16 %v258
    %v298 = vunpack.c.l.b16 %v259
    %v299 = vunpack.c.l.b16 %v260
    %v300 = vunpack.c.l.b16 %v261
    %v301 = vunpack.c.l.b16 %v262
    %v302 = vunpack.c.l.b16 %v263
    %v303 = vunpack.c.l.b16 %v264
    %v304 = vunpack.c.l.b16 %v265
    %v305 = vpack.c.b16 %v290, %v289
    %v306 = vpack.c.b16 %v292, %v291
    %v307 = vpack.c.b16 %v294, %v293
    %v308 = vpack.c.b16 %v296, %v295
    %v309 = vpack.c.b16 %v298, %v297
    %v310 = vpack.c.b16 %v300, %v299
    %v311 = vpack.c.b16 %v302, %v301
    %v312 = vpack.c.b16 %v304, %v303
    %321 = vmatprep.subr.bf16.mxu0 0
    %322 = vmatpush1.bf16.msra.mxu0 %v305
    %323 = vmatprep.subr.bf16.mxu0 0
    %324 = vmatpush1.bf16.msra.mxu0 %v306
    %325 = vmatprep.subr.bf16.mxu0 0
    %326 = vmatpush1.bf16.msra.mxu0 %v307
    %327 = vmatprep.subr.bf16.mxu0 0
    %328 = vmatpush1.bf16.msra.mxu0 %v308
    %329 = vmatprep.subr.bf16.mxu0 0
    %330 = vmatpush1.bf16.msra.mxu0 %v309
    %331 = vmatprep.subr.bf16.mxu0 0
    %332 = vmatpush1.bf16.msra.mxu0 %v310
    %333 = vmatprep.subr.bf16.mxu0 0
    %334 = vmatpush1.bf16.msra.mxu0 %v311
    %335 = vmatprep.subr.bf16.mxu0 0
    %336 = vmatpush1.bf16.msra.mxu0 %v312
    %337 = vmatprep.subr.bf16.mxu0 0
    %338 = vmatpush1.bf16.msra.mxu0 0
    %339 = vmatprep.subr.bf16.mxu0 0
    %340 = vmatpush1.bf16.msra.mxu0 0
    %341 = vmatprep.subr.bf16.mxu0 0
    %342 = vmatpush1.bf16.msra.mxu0 0
    %343 = vmatprep.subr.bf16.mxu0 0
    %344 = vmatpush1.bf16.msra.mxu0 0
    %345 = vmatprep.subr.bf16.mxu0 0
    %346 = vmatpush1.bf16.msra.mxu0 0
    %347 = vmatprep.subr.bf16.mxu0 0
    %348 = vmatpush1.bf16.msra.mxu0 0
    %349 = vmatprep.subr.bf16.mxu0 0
    %350 = vmatpush1.bf16.msra.mxu0 0
    %351 = vmatprep.subr.bf16.mxu0 0
    %352 = vmatpush1.bf16.msra.mxu0 0
    %353 = vmatprep.mubr.bf16.mxu0 0
    %354 = vmatmul.mubr.bf16.gmra.mrb[0].mxu0 %v249
    %v355 = vpop.f32.mrb[0].mxu0
    %v356 = vadd.f32 %v271, %v355
    %v357 = vpop.f32.mrb[0].mxu0
    %v358 = vpop.f32.mrb[0].mxu0
    %v359 = vpop.f32.mrb[0].mxu0
    %360 = vdwg.mxu0
    %361 = vst [vmem:[#allocation7] sm:$0xff] %v356
    // Predicated region
    $region38: #{qconnect_forward.1} parent=1 // pred_check
      _
    $region39: #{qconnect_forward.1} parent=1 // pred_check_branch
      %363 = sbr.rel (0) target = $region41
    $region40: #{qconnect_forward.1} parent=1 // pred_region
      %s365 = ssub.s32 128, 128
      %366 = vsyncadd [#allocation4], %s365
      %s368 = sshll.u32 [#allocation7], 4
      %s369 = int_to_ptr.vmem [resolvable:$true] %s368
      %371 = dma.vmem_to_hbm [thread:$0]  %s369, 128, %s7, [#allocation4]
    $region41: #{qconnect_forward.1} parent=1 // pred_fallthru
      _
    // Predicated region
    $region42: #{qconnect_forward.1} parent=1 // pred_check
      _
    $region43: #{qconnect_forward.1} parent=1 // pred_check_branch
      %373 = sbr.rel (0) target = $region45
    $region44: #{qconnect_forward.1} parent=1 // pred_region
      %374 = dma.done [#allocation4], 128
    $region45: #{qconnect_forward.1} parent=1 // pred_fallthru
      _
    %375 = vsyncpa [#allocation3], 1
    %376 = vsyncpa [#allocation6], 1
    %377 = vsyncpa [#allocation4], 1

</llo_original>
